<compile_context>
chip_gen: v5e
topology: v5e:2x2
jax: 0.10.0
libtpu: 0.0.40
codegen_flags: <defaults>
</compile_context>

<pallas_src>
import jax
import jax.numpy as jnp
from jax import lax
from jax.experimental import pallas as pl
from jax.experimental.pallas import tpu as pltpu


def _lstm_kernel(x_ref, wih_ref, whh_ref, b_ref, wout_ref, bout_ref, out_ref):
    """Whole sequence in one kernel invocation; recurrence statically unrolled.

    x_ref     : (S, I)   inputs
    wih_ref   : (I, 4H)  W_ih^T, PyTorch gate order (i, f, g, o); i/f/o cols * 0.5
    whh_ref   : (H, 4H)  W_hh^T; i/f/o cols * 0.5
    b_ref     : (1, 4H)  b_ih + b_hh; i/f/o cols * 0.5
    wout_ref  : (H, O)   hidden2out weight^T
    bout_ref  : (1, O)   hidden2out bias
    out_ref   : (S, O)   output
    """
    H = whh_ref.shape[0]
    S = x_ref.shape[0]

    # ---- hoisted input projection: one big MXU matmul for all timesteps ----
    pre_gates = (jnp.dot(x_ref[...], wih_ref[...],
                         preferred_element_type=jnp.float32)
                 + b_ref[...])                                   # (S, 4H)

    whh = whh_ref[...]                                           # loop-invariant

    # ---- serial recurrence (only h @ whh + gate math on the critical path) ----
    h = jnp.zeros((1, H), jnp.float32)
    c = jnp.zeros((1, H), jnp.float32)
    hs = []                                                       # vreg-resident history
    for t in range(S):                                            # static unroll
        gates = (pre_gates[t:t + 1, :]
                 + jnp.dot(h, whh, preferred_element_type=jnp.float32))  # (1,4H)
        # Single full-width EUP dispatch per step: i/f/o pre-activations were
        # halved at pack time, so sigmoid(x) = 0.5*tanh(x/2) + 0.5.
        t_all = jnp.tanh(gates)
        s_all = 0.5 * t_all + 0.5                                 # full-width VPU FMA
        i_g = s_all[:, 0:H]
        f_g = s_all[:, H:2 * H]
        g_g = t_all[:, 2 * H:3 * H]
        o_g = s_all[:, 3 * H:4 * H]
        c = f_g * c + i_g * g_g
        h = o_g * jnp.tanh(c)
        hs.append(h)

    # ---- hoisted output head: one (S,H)x(H,O) matmul + single store ----
    h_all = jnp.concatenate(hs, axis=0)                           # (S, H), in vregs
    out_ref[...] = (jnp.dot(h_all, wout_ref[...],
                            preferred_element_type=jnp.float32)
                    + bout_ref[...])


def lstm_forward(x, wih_t, whh_t, b, wout_t, bout):
    """x: (S, I); params already packed via pack_lstm_params."""
    S, I = x.shape
    H = whh_t.shape[0]
    O = wout_t.shape[1]

    cost = pl.CostEstimate(
        flops=2 * S * (I + H) * 4 * H + 2 * S * H * O,
        transcendentals=5 * S * H,   # 4H-wide tanh(gates) + H-wide tanh(c) per step
        bytes_accessed=4 * (x.size + wih_t.size + whh_t.size + b.size
                            + wout_t.size + bout.size + S * O),
    )
    vmem_spec = pl.BlockSpec(memory_space=pltpu.MemorySpace.VMEM)

    return pl.pallas_call(
        _lstm_kernel,
        out_shape=jax.ShapeDtypeStruct((S, O), jnp.float32),
        in_specs=[vmem_spec] * 6,
        out_specs=vmem_spec,
        cost_estimate=cost,
    )(x, wih_t, whh_t, b, wout_t, bout)


def init_params(key, input_dim, hidden_dim, output_dim):
    """Deterministic PyTorch-style uniform init U(-1/sqrt(H), 1/sqrt(H)).

    Returns canonical (un-scaled) params: (wih_t, whh_t, b, wout_t, bout).
    """
    ks = jax.random.split(key, 6)
    k_lstm = 1.0 / jnp.sqrt(hidden_dim)
    w_ih = jax.random.uniform(ks[0], (4 * hidden_dim, input_dim),
                              jnp.float32, -k_lstm, k_lstm)
    w_hh = jax.random.uniform(ks[1], (4 * hidden_dim, hidden_dim),
                              jnp.float32, -k_lstm, k_lstm)
    b_ih = jax.random.uniform(ks[2], (4 * hidden_dim,),
                              jnp.float32, -k_lstm, k_lstm)
    b_hh = jax.random.uniform(ks[3], (4 * hidden_dim,),
                              jnp.float32, -k_lstm, k_lstm)
    k_lin = 1.0 / jnp.sqrt(hidden_dim)
    w_out = jax.random.uniform(ks[4], (output_dim, hidden_dim),
                               jnp.float32, -k_lin, k_lin)
    b_out = jax.random.uniform(ks[5], (output_dim,),
                               jnp.float32, -k_lin, k_lin)
    return (w_ih.T, w_hh.T, (b_ih + b_hh)[None, :], w_out.T, b_out[None, :])


def pack_lstm_params(wih_t, whh_t, b, wout_t, bout):
    """Kernel packing: halve the i/f/o gate columns so the kernel recovers
    sigmoid(x) as 0.5*tanh(x/2)+0.5 from a single tanh dispatch."""
    H = whh_t.shape[0]
    scale = jnp.concatenate([
        jnp.full((H,), 0.5, jnp.float32),   # i
        jnp.full((H,), 0.5, jnp.float32),   # f
        jnp.ones((H,), jnp.float32),        # g (stays tanh)
        jnp.full((H,), 0.5, jnp.float32),   # o
    ])[None, :]
    return (wih_t * scale, whh_t * scale, b * scale, wout_t, bout)


def lstm_forward_ref(x, wih_t, whh_t, b, wout_t, bout):
    """Pure-JAX reference (canonical nn.LSTM math, lax.scan)."""
    H = whh_t.shape[0]

    def step(carry, x_t):
        h, c = carry
        gates = x_t[None, :] @ wih_t + h @ whh_t + b
        i_g = jax.nn.sigmoid(gates[:, 0:H])
        f_g = jax.nn.sigmoid(gates[:, H:2 * H])
        g_g = jnp.tanh(gates[:, 2 * H:3 * H])
        o_g = jax.nn.sigmoid(gates[:, 3 * H:4 * H])
        c_new = f_g * c + i_g * g_g
        h_new = o_g * jnp.tanh(c_new)
        y = h_new @ wout_t + bout
        return (h_new, c_new), y[0]

    h0 = jnp.zeros((1, H), jnp.float32)
    c0 = jnp.zeros((1, H), jnp.float32)
    _, ys = lax.scan(step, (h0, c0), x)
    return ys


if __name__ == "__main__":
    seq_len, input_dim, hidden_dim, output_dim = 8, 16, 32, 8

    key = jax.random.PRNGKey(0)
    k_x, k_p = jax.random.split(key)
    x = jax.random.normal(k_x, (seq_len, input_dim), jnp.float32)
    params = init_params(k_p, input_dim, hidden_dim, output_dim)
    packed = pack_lstm_params(*params)

    out = lstm_forward(x, *packed)
    out = jax.block_until_ready(out)

    ref = lstm_forward_ref(x, *params)
    assert out.shape == (seq_len, output_dim)
    assert jnp.allclose(out, ref, atol=1e-5, rtol=1e-5), "mismatch vs reference"

    print("KERNEL_OK")
</pallas_src>

<mosaic_0001>
module attributes {stable_mosaic.version = 11 : i64} {
  func.func @_lstm_kernel(%arg0: memref<8x16xf32, #tpu.memory_space<vmem>>, %arg1: memref<16x128xf32, #tpu.memory_space<vmem>>, %arg2: memref<32x128xf32, #tpu.memory_space<vmem>>, %arg3: memref<1x128xf32, #tpu.memory_space<vmem>>, %arg4: memref<32x8xf32, #tpu.memory_space<vmem>>, %arg5: memref<1x8xf32, #tpu.memory_space<vmem>>, %arg6: memref<8x8xf32, #tpu.memory_space<vmem>>) attributes {dimension_semantics = [], scalar_prefetch = 0 : i64, scratch_operands = 0 : i64, tpu.core_type = #tpu.core_type<tc>} {
    %c0 = arith.constant 0 : index
    %c0_0 = arith.constant 0 : index
    %0 = vector.load %arg0[%c0, %c0_0] : memref<8x16xf32, #tpu.memory_space<vmem>>, vector<8x16xf32>
    %c0_1 = arith.constant 0 : index
    %c0_2 = arith.constant 0 : index
    %1 = vector.load %arg1[%c0_1, %c0_2] : memref<16x128xf32, #tpu.memory_space<vmem>>, vector<16x128xf32>
    %cst = arith.constant dense<0.000000e+00> : vector<8x128xf32>
    %2 = tpu.matmul %0, %1, %cst {dimension_numbers = #tpu.dot_dimension_numbers<[1], [0], [0], [1], [0, 0, 1, 1], [], []>} : vector<8x16xf32>, vector<16x128xf32>, vector<8x128xf32> -> vector<8x128xf32>
    %c0_3 = arith.constant 0 : index
    %c0_4 = arith.constant 0 : index
    %3 = vector.load %arg3[%c0_3, %c0_4] : memref<1x128xf32, #tpu.memory_space<vmem>>, vector<1x128xf32>
    %4 = vector.broadcast %3 : vector<1x128xf32> to vector<8x128xf32>
    %5 = arith.addf %2, %4 : vector<8x128xf32>
    %c0_5 = arith.constant 0 : index
    %c0_6 = arith.constant 0 : index
    %6 = vector.load %arg2[%c0_5, %c0_6] : memref<32x128xf32, #tpu.memory_space<vmem>>, vector<32x128xf32>
    %cst_7 = arith.constant 0.000000e+00 : f32
    %7 = vector.broadcast %cst_7 : f32 to vector<1x32xf32>
    %cst_8 = arith.constant 0.000000e+00 : f32
    %8 = vector.broadcast %cst_8 : f32 to vector<1x32xf32>
    %9 = vector.extract_strided_slice %5 {offsets = [0, 0], sizes = [1, 128], strides = [1, 1]} : vector<8x128xf32> to vector<1x128xf32>
    %cst_9 = arith.constant dense<0.000000e+00> : vector<1x128xf32>
    %10 = tpu.matmul %7, %6, %cst_9 {dimension_numbers = #tpu.dot_dimension_numbers<[1], [0], [0], [1], [0, 0, 1, 1], [], []>} : vector<1x32xf32>, vector<32x128xf32>, vector<1x128xf32> -> vector<1x128xf32>
    %11 = arith.addf %9, %10 : vector<1x128xf32>
    %12 = math.tanh %11 : vector<1x128xf32>
    %cst_10 = arith.constant 5.000000e-01 : f32
    %13 = vector.broadcast %cst_10 : f32 to vector<1x128xf32>
    %14 = arith.mulf %13, %12 : vector<1x128xf32>
    %cst_11 = arith.constant 5.000000e-01 : f32
    %15 = vector.broadcast %cst_11 : f32 to vector<1x128xf32>
    %16 = arith.addf %14, %15 : vector<1x128xf32>
    %17 = vector.extract_strided_slice %16 {offsets = [0, 0], sizes = [1, 32], strides = [1, 1]} : vector<1x128xf32> to vector<1x32xf32>
    %18 = vector.extract_strided_slice %16 {offsets = [0, 32], sizes = [1, 32], strides = [1, 1]} : vector<1x128xf32> to vector<1x32xf32>
    %19 = vector.extract_strided_slice %12 {offsets = [0, 64], sizes = [1, 32], strides = [1, 1]} : vector<1x128xf32> to vector<1x32xf32>
    %20 = vector.extract_strided_slice %16 {offsets = [0, 96], sizes = [1, 32], strides = [1, 1]} : vector<1x128xf32> to vector<1x32xf32>
    %21 = arith.mulf %18, %8 : vector<1x32xf32>
    %22 = arith.mulf %17, %19 : vector<1x32xf32>
    %23 = arith.addf %21, %22 : vector<1x32xf32>
    %24 = math.tanh %23 : vector<1x32xf32>
    %25 = arith.mulf %20, %24 : vector<1x32xf32>
    %26 = vector.extract_strided_slice %5 {offsets = [1, 0], sizes = [1, 128], strides = [1, 1]} : vector<8x128xf32> to vector<1x128xf32>
    %cst_12 = arith.constant dense<0.000000e+00> : vector<1x128xf32>
    %27 = tpu.matmul %25, %6, %cst_12 {dimension_numbers = #tpu.dot_dimension_numbers<[1], [0], [0], [1], [0, 0, 1, 1], [], []>} : vector<1x32xf32>, vector<32x128xf32>, vector<1x128xf32> -> vector<1x128xf32>
    %28 = arith.addf %26, %27 : vector<1x128xf32>
    %29 = math.tanh %28 : vector<1x128xf32>
    %cst_13 = arith.constant 5.000000e-01 : f32
    %30 = vector.broadcast %cst_13 : f32 to vector<1x128xf32>
    %31 = arith.mulf %30, %29 : vector<1x128xf32>
    %cst_14 = arith.constant 5.000000e-01 : f32
    %32 = vector.broadcast %cst_14 : f32 to vector<1x128xf32>
    %33 = arith.addf %31, %32 : vector<1x128xf32>
    %34 = vector.extract_strided_slice %33 {offsets = [0, 0], sizes = [1, 32], strides = [1, 1]} : vector<1x128xf32> to vector<1x32xf32>
    %35 = vector.extract_strided_slice %33 {offsets = [0, 32], sizes = [1, 32], strides = [1, 1]} : vector<1x128xf32> to vector<1x32xf32>
    %36 = vector.extract_strided_slice %29 {offsets = [0, 64], sizes = [1, 32], strides = [1, 1]} : vector<1x128xf32> to vector<1x32xf32>
    %37 = vector.extract_strided_slice %33 {offsets = [0, 96], sizes = [1, 32], strides = [1, 1]} : vector<1x128xf32> to vector<1x32xf32>
    %38 = arith.mulf %35, %23 : vector<1x32xf32>
    %39 = arith.mulf %34, %36 : vector<1x32xf32>
    %40 = arith.addf %38, %39 : vector<1x32xf32>
    %41 = math.tanh %40 : vector<1x32xf32>
    %42 = arith.mulf %37, %41 : vector<1x32xf32>
    %43 = vector.extract_strided_slice %5 {offsets = [2, 0], sizes = [1, 128], strides = [1, 1]} : vector<8x128xf32> to vector<1x128xf32>
    %cst_15 = arith.constant dense<0.000000e+00> : vector<1x128xf32>
    %44 = tpu.matmul %42, %6, %cst_15 {dimension_numbers = #tpu.dot_dimension_numbers<[1], [0], [0], [1], [0, 0, 1, 1], [], []>} : vector<1x32xf32>, vector<32x128xf32>, vector<1x128xf32> -> vector<1x128xf32>
    %45 = arith.addf %43, %44 : vector<1x128xf32>
    %46 = math.tanh %45 : vector<1x128xf32>
    %cst_16 = arith.constant 5.000000e-01 : f32
    %47 = vector.broadcast %cst_16 : f32 to vector<1x128xf32>
    %48 = arith.mulf %47, %46 : vector<1x128xf32>
    %cst_17 = arith.constant 5.000000e-01 : f32
    %49 = vector.broadcast %cst_17 : f32 to vector<1x128xf32>
    %50 = arith.addf %48, %49 : vector<1x128xf32>
    %51 = vector.extract_strided_slice %50 {offsets = [0, 0], sizes = [1, 32], strides = [1, 1]} : vector<1x128xf32> to vector<1x32xf32>
    %52 = vector.extract_strided_slice %50 {offsets = [0, 32], sizes = [1, 32], strides = [1, 1]} : vector<1x128xf32> to vector<1x32xf32>
    %53 = vector.extract_strided_slice %46 {offsets = [0, 64], sizes = [1, 32], strides = [1, 1]} : vector<1x128xf32> to vector<1x32xf32>
    %54 = vector.extract_strided_slice %50 {offsets = [0, 96], sizes = [1, 32], strides = [1, 1]} : vector<1x128xf32> to vector<1x32xf32>
    %55 = arith.mulf %52, %40 : vector<1x32xf32>
    %56 = arith.mulf %51, %53 : vector<1x32xf32>
    %57 = arith.addf %55, %56 : vector<1x32xf32>
    %58 = math.tanh %57 : vector<1x32xf32>
    %59 = arith.mulf %54, %58 : vector<1x32xf32>
    %60 = vector.extract_strided_slice %5 {offsets = [3, 0], sizes = [1, 128], strides = [1, 1]} : vector<8x128xf32> to vector<1x128xf32>
    %cst_18 = arith.constant dense<0.000000e+00> : vector<1x128xf32>
    %61 = tpu.matmul %59, %6, %cst_18 {dimension_numbers = #tpu.dot_dimension_numbers<[1], [0], [0], [1], [0, 0, 1, 1], [], []>} : vector<1x32xf32>, vector<32x128xf32>, vector<1x128xf32> -> vector<1x128xf32>
    %62 = arith.addf %60, %61 : vector<1x128xf32>
    %63 = math.tanh %62 : vector<1x128xf32>
    %cst_19 = arith.constant 5.000000e-01 : f32
    %64 = vector.broadcast %cst_19 : f32 to vector<1x128xf32>
    %65 = arith.mulf %64, %63 : vector<1x128xf32>
    %cst_20 = arith.constant 5.000000e-01 : f32
    %66 = vector.broadcast %cst_20 : f32 to vector<1x128xf32>
    %67 = arith.addf %65, %66 : vector<1x128xf32>
    %68 = vector.extract_strided_slice %67 {offsets = [0, 0], sizes = [1, 32], strides = [1, 1]} : vector<1x128xf32> to vector<1x32xf32>
    %69 = vector.extract_strided_slice %67 {offsets = [0, 32], sizes = [1, 32], strides = [1, 1]} : vector<1x128xf32> to vector<1x32xf32>
    %70 = vector.extract_strided_slice %63 {offsets = [0, 64], sizes = [1, 32], strides = [1, 1]} : vector<1x128xf32> to vector<1x32xf32>
    %71 = vector.extract_strided_slice %67 {offsets = [0, 96], sizes = [1, 32], strides = [1, 1]} : vector<1x128xf32> to vector<1x32xf32>
    %72 = arith.mulf %69, %57 : vector<1x32xf32>
    %73 = arith.mulf %68, %70 : vector<1x32xf32>
    %74 = arith.addf %72, %73 : vector<1x32xf32>
    %75 = math.tanh %74 : vector<1x32xf32>
    %76 = arith.mulf %71, %75 : vector<1x32xf32>
    %77 = vector.extract_strided_slice %5 {offsets = [4, 0], sizes = [1, 128], strides = [1, 1]} : vector<8x128xf32> to vector<1x128xf32>
    %cst_21 = arith.constant dense<0.000000e+00> : vector<1x128xf32>
    %78 = tpu.matmul %76, %6, %cst_21 {dimension_numbers = #tpu.dot_dimension_numbers<[1], [0], [0], [1], [0, 0, 1, 1], [], []>} : vector<1x32xf32>, vector<32x128xf32>, vector<1x128xf32> -> vector<1x128xf32>
    %79 = arith.addf %77, %78 : vector<1x128xf32>
    %80 = math.tanh %79 : vector<1x128xf32>
    %cst_22 = arith.constant 5.000000e-01 : f32
    %81 = vector.broadcast %cst_22 : f32 to vector<1x128xf32>
    %82 = arith.mulf %81, %80 : vector<1x128xf32>
    %cst_23 = arith.constant 5.000000e-01 : f32
    %83 = vector.broadcast %cst_23 : f32 to vector<1x128xf32>
    %84 = arith.addf %82, %83 : vector<1x128xf32>
    %85 = vector.extract_strided_slice %84 {offsets = [0, 0], sizes = [1, 32], strides = [1, 1]} : vector<1x128xf32> to vector<1x32xf32>
    %86 = vector.extract_strided_slice %84 {offsets = [0, 32], sizes = [1, 32], strides = [1, 1]} : vector<1x128xf32> to vector<1x32xf32>
    %87 = vector.extract_strided_slice %80 {offsets = [0, 64], sizes = [1, 32], strides = [1, 1]} : vector<1x128xf32> to vector<1x32xf32>
    %88 = vector.extract_strided_slice %84 {offsets = [0, 96], sizes = [1, 32], strides = [1, 1]} : vector<1x128xf32> to vector<1x32xf32>
    %89 = arith.mulf %86, %74 : vector<1x32xf32>
    %90 = arith.mulf %85, %87 : vector<1x32xf32>
    %91 = arith.addf %89, %90 : vector<1x32xf32>
    %92 = math.tanh %91 : vector<1x32xf32>
    %93 = arith.mulf %88, %92 : vector<1x32xf32>
    %94 = vector.extract_strided_slice %5 {offsets = [5, 0], sizes = [1, 128], strides = [1, 1]} : vector<8x128xf32> to vector<1x128xf32>
    %cst_24 = arith.constant dense<0.000000e+00> : vector<1x128xf32>
    %95 = tpu.matmul %93, %6, %cst_24 {dimension_numbers = #tpu.dot_dimension_numbers<[1], [0], [0], [1], [0, 0, 1, 1], [], []>} : vector<1x32xf32>, vector<32x128xf32>, vector<1x128xf32> -> vector<1x128xf32>
    %96 = arith.addf %94, %95 : vector<1x128xf32>
    %97 = math.tanh %96 : vector<1x128xf32>
    %cst_25 = arith.constant 5.000000e-01 : f32
    %98 = vector.broadcast %cst_25 : f32 to vector<1x128xf32>
    %99 = arith.mulf %98, %97 : vector<1x128xf32>
    %cst_26 = arith.constant 5.000000e-01 : f32
    %100 = vector.broadcast %cst_26 : f32 to vector<1x128xf32>
    %101 = arith.addf %99, %100 : vector<1x128xf32>
    %102 = vector.extract_strided_slice %101 {offsets = [0, 0], sizes = [1, 32], strides = [1, 1]} : vector<1x128xf32> to vector<1x32xf32>
    %103 = vector.extract_strided_slice %101 {offsets = [0, 32], sizes = [1, 32], strides = [1, 1]} : vector<1x128xf32> to vector<1x32xf32>
    %104 = vector.extract_strided_slice %97 {offsets = [0, 64], sizes = [1, 32], strides = [1, 1]} : vector<1x128xf32> to vector<1x32xf32>
    %105 = vector.extract_strided_slice %101 {offsets = [0, 96], sizes = [1, 32], strides = [1, 1]} : vector<1x128xf32> to vector<1x32xf32>
    %106 = arith.mulf %103, %91 : vector<1x32xf32>
    %107 = arith.mulf %102, %104 : vector<1x32xf32>
    %108 = arith.addf %106, %107 : vector<1x32xf32>
    %109 = math.tanh %108 : vector<1x32xf32>
    %110 = arith.mulf %105, %109 : vector<1x32xf32>
    %111 = vector.extract_strided_slice %5 {offsets = [6, 0], sizes = [1, 128], strides = [1, 1]} : vector<8x128xf32> to vector<1x128xf32>
    %cst_27 = arith.constant dense<0.000000e+00> : vector<1x128xf32>
    %112 = tpu.matmul %110, %6, %cst_27 {dimension_numbers = #tpu.dot_dimension_numbers<[1], [0], [0], [1], [0, 0, 1, 1], [], []>} : vector<1x32xf32>, vector<32x128xf32>, vector<1x128xf32> -> vector<1x128xf32>
    %113 = arith.addf %111, %112 : vector<1x128xf32>
    %114 = math.tanh %113 : vector<1x128xf32>
    %cst_28 = arith.constant 5.000000e-01 : f32
    %115 = vector.broadcast %cst_28 : f32 to vector<1x128xf32>
    %116 = arith.mulf %115, %114 : vector<1x128xf32>
    %cst_29 = arith.constant 5.000000e-01 : f32
    %117 = vector.broadcast %cst_29 : f32 to vector<1x128xf32>
    %118 = arith.addf %116, %117 : vector<1x128xf32>
    %119 = vector.extract_strided_slice %118 {offsets = [0, 0], sizes = [1, 32], strides = [1, 1]} : vector<1x128xf32> to vector<1x32xf32>
    %120 = vector.extract_strided_slice %118 {offsets = [0, 32], sizes = [1, 32], strides = [1, 1]} : vector<1x128xf32> to vector<1x32xf32>
    %121 = vector.extract_strided_slice %114 {offsets = [0, 64], sizes = [1, 32], strides = [1, 1]} : vector<1x128xf32> to vector<1x32xf32>
    %122 = vector.extract_strided_slice %118 {offsets = [0, 96], sizes = [1, 32], strides = [1, 1]} : vector<1x128xf32> to vector<1x32xf32>
    %123 = arith.mulf %120, %108 : vector<1x32xf32>
    %124 = arith.mulf %119, %121 : vector<1x32xf32>
    %125 = arith.addf %123, %124 : vector<1x32xf32>
    %126 = math.tanh %125 : vector<1x32xf32>
    %127 = arith.mulf %122, %126 : vector<1x32xf32>
    %128 = vector.extract_strided_slice %5 {offsets = [7, 0], sizes = [1, 128], strides = [1, 1]} : vector<8x128xf32> to vector<1x128xf32>
    %cst_30 = arith.constant dense<0.000000e+00> : vector<1x128xf32>
    %129 = tpu.matmul %127, %6, %cst_30 {dimension_numbers = #tpu.dot_dimension_numbers<[1], [0], [0], [1], [0, 0, 1, 1], [], []>} : vector<1x32xf32>, vector<32x128xf32>, vector<1x128xf32> -> vector<1x128xf32>
    %130 = arith.addf %128, %129 : vector<1x128xf32>
    %131 = math.tanh %130 : vector<1x128xf32>
    %cst_31 = arith.constant 5.000000e-01 : f32
    %132 = vector.broadcast %cst_31 : f32 to vector<1x128xf32>
    %133 = arith.mulf %132, %131 : vector<1x128xf32>
    %cst_32 = arith.constant 5.000000e-01 : f32
    %134 = vector.broadcast %cst_32 : f32 to vector<1x128xf32>
    %135 = arith.addf %133, %134 : vector<1x128xf32>
    %136 = vector.extract_strided_slice %135 {offsets = [0, 0], sizes = [1, 32], strides = [1, 1]} : vector<1x128xf32> to vector<1x32xf32>
    %137 = vector.extract_strided_slice %135 {offsets = [0, 32], sizes = [1, 32], strides = [1, 1]} : vector<1x128xf32> to vector<1x32xf32>
    %138 = vector.extract_strided_slice %131 {offsets = [0, 64], sizes = [1, 32], strides = [1, 1]} : vector<1x128xf32> to vector<1x32xf32>
    %139 = vector.extract_strided_slice %135 {offsets = [0, 96], sizes = [1, 32], strides = [1, 1]} : vector<1x128xf32> to vector<1x32xf32>
    %140 = arith.mulf %137, %125 : vector<1x32xf32>
    %141 = arith.mulf %136, %138 : vector<1x32xf32>
    %142 = arith.addf %140, %141 : vector<1x32xf32>
    %143 = math.tanh %142 : vector<1x32xf32>
    %144 = arith.mulf %139, %143 : vector<1x32xf32>
    %145 = tpu.concatenate %25, %42, %59, %76, %93, %110, %127, %144 in 0 : vector<1x32xf32>, vector<1x32xf32>, vector<1x32xf32>, vector<1x32xf32>, vector<1x32xf32>, vector<1x32xf32>, vector<1x32xf32>, vector<1x32xf32> -> vector<8x32xf32>
    %c0_33 = arith.constant 0 : index
    %c0_34 = arith.constant 0 : index
    %146 = vector.load %arg4[%c0_33, %c0_34] : memref<32x8xf32, #tpu.memory_space<vmem>>, vector<32x8xf32>
    %cst_35 = arith.constant dense<0.000000e+00> : vector<8x8xf32>
    %147 = tpu.matmul %145, %146, %cst_35 {dimension_numbers = #tpu.dot_dimension_numbers<[1], [0], [0], [1], [0, 0, 1, 1], [], []>} : vector<8x32xf32>, vector<32x8xf32>, vector<8x8xf32> -> vector<8x8xf32>
    %c0_36 = arith.constant 0 : index
    %c0_37 = arith.constant 0 : index
    %148 = vector.load %arg5[%c0_36, %c0_37] : memref<1x8xf32, #tpu.memory_space<vmem>>, vector<1x8xf32>
    %149 = vector.broadcast %148 : vector<1x8xf32> to vector<8x8xf32>
    %150 = arith.addf %147, %149 : vector<8x8xf32>
    %c0_38 = arith.constant 0 : index
    %c0_39 = arith.constant 0 : index
    %151 = vector.load %arg6[%c0_38, %c0_39] : memref<8x8xf32, #tpu.memory_space<vmem>>, vector<8x8xf32>
    tpu.vector_store %arg6[%c0_38, %c0_39], %150 {strides = array<i32>} : memref<8x8xf32, #tpu.memory_space<vmem>>, vector<8x8xf32>,
    return
  }
}

</mosaic_0001>

<llo_original>
// kernel: tpu_custom_call.1
$region0: #{tpu_custom_call.1}
  #allocation0 [shape = 'u32[]', space=smem, size = 0x4, offset = 0x4, fixed_abs, tag = 'smem constant byte address 0x4 - core index']
  #allocation1 [shape = 'u32[72,128]{1,0:T(1,128)}', space=vmem, size = 0x9000, scoped, tag = 'internal scratch']
  %s0 = inlined_call_operand.vmem [shape: f32[8,16], index: 0, kind: input, shape index: {}]
  %s1 = inlined_call_operand.hbm [shape: f32[16,128], index: 1, kind: input, shape index: {}]
  %s2 = inlined_call_operand.vmem [shape: f32[32,128], index: 2, kind: input, shape index: {}]
  %s3 = inlined_call_operand.vmem [shape: f32[1,128], index: 3, kind: input, shape index: {}]
  %s4 = inlined_call_operand.vmem [shape: f32[32,8], index: 4, kind: input, shape index: {}]
  %s5 = inlined_call_operand.vmem [shape: f32[1,8], index: 5, kind: input, shape index: {}]
  %s6 = inlined_call_operand.hbm [shape: f32[8,8], index: 6, kind: output, shape index: {}]
  %s7 = sld [smem:[#allocation0]]
  $region38: #{tpu_custom_call.1} parent=0
    _
  %s9 = ssub.s32 1, %s7
  %s10 = scalar_select 0, %s9, %s7
  $region1: #{tpu_custom_call.1} parent=0
    #allocation2 [shape = 'u8[8192]{0}', space=vmem, size = 0x2000, scoped, tag = 'input window, operand 1, single buffered']
    #allocation3 [shape = 's32[1]{0}', space=sflag, size = 0x4, scoped, tag = 'scoped memory for tpu_custom_call.1']
    #allocation4 [shape = 's32[1]{0}', space=sflag, size = 0x4, scoped, tag = 'scoped memory for tpu_custom_call.1']
    #allocation5 [shape = 'u8[4096]{0}', space=vmem, size = 0x1000, scoped, tag = 'output window, operand 0, single buffered']
    %11 = vsyncpa [#allocation3], 0
    %12 = vsyncpa [#allocation4], 0
    // Predicated region
    $region2: #{tpu_custom_call.1} parent=1 // pred_check
      _
    $region3: #{tpu_custom_call.1} parent=1 // pred_check_branch
      %14 = sbr.rel (0) target = $region5
    $region4: #{tpu_custom_call.1} parent=1 // pred_region
      _
    $region5: #{tpu_custom_call.1} parent=1 // pred_fallthru
      _
    // Predicated region
    $region6: #{tpu_custom_call.1} parent=1 // pred_check
      _
    $region7: #{tpu_custom_call.1} parent=1 // pred_check_branch
      %16 = sbr.rel (0) target = $region9
    $region8: #{tpu_custom_call.1} parent=1 // pred_region
      %18 = vsyncadd [#allocation3], 0
      %s19 = sshll.u32 %s1, 4
      %s20 = int_to_ptr.hbm [resolvable:$true] %s19
      %s21 = sshll.u32 [#allocation2], 4
      %s22 = int_to_ptr.vmem [resolvable:$true] %s21
      %27 = dma.hbm_to_vmem [thread:$0]  %s20, 256, %s22, [#allocation3], 128, 128, 8
    $region9: #{tpu_custom_call.1} parent=1 // pred_fallthru
      _
    // Predicated region
    $region10: #{tpu_custom_call.1} parent=1 // pred_check
      _
    $region11: #{tpu_custom_call.1} parent=1 // pred_check_branch
      %29 = sbr.rel (0) target = $region13
    $region12: #{tpu_custom_call.1} parent=1 // pred_region
      _
    $region13: #{tpu_custom_call.1} parent=1 // pred_fallthru
      _
    // Predicated region
    $region14: #{tpu_custom_call.1} parent=1 // pred_check
      _
    $region15: #{tpu_custom_call.1} parent=1 // pred_check_branch
      %31 = sbr.rel (0) target = $region17
    $region16: #{tpu_custom_call.1} parent=1 // pred_region
      _
    $region17: #{tpu_custom_call.1} parent=1 // pred_fallthru
      _
    // Predicated region
    $region18: #{tpu_custom_call.1} parent=1 // pred_check
      _
    $region19: #{tpu_custom_call.1} parent=1 // pred_check_branch
      %33 = sbr.rel (0) target = $region21
    $region20: #{tpu_custom_call.1} parent=1 // pred_region
      _
    $region21: #{tpu_custom_call.1} parent=1 // pred_fallthru
      _
    // Predicated region
    $region22: #{tpu_custom_call.1} parent=1 // pred_check
      _
    $region23: #{tpu_custom_call.1} parent=1 // pred_check_branch
      %35 = sbr.rel (0) target = $region25
    $region24: #{tpu_custom_call.1} parent=1 // pred_region
      _
    $region25: #{tpu_custom_call.1} parent=1 // pred_fallthru
      _
    // Predicated region
    $region26: #{tpu_custom_call.1} parent=1 // pred_check
      _
    $region27: #{tpu_custom_call.1} parent=1 // pred_check_branch
      %37 = sbr.rel (0) target = $region29
    $region28: #{tpu_custom_call.1} parent=1 // pred_region
      %39 = dma.done [#allocation3], 256
    $region29: #{tpu_custom_call.1} parent=1 // pred_fallthru
      _
    %v40 = vld [vmem:[%s0] sm:$0xff]
    %v41 = vld [vmem:[#allocation2] sm:$0xff]
    %v42 = vld [vmem:[#allocation2 + $0x8] sm:$0xff]
    %v43 = vld [vmem:[%s3] sm:$0x1]
    %v45 = vperm.slane %v43, 0
    %vm47 = vcmask 130048
    %v49 = vsel %vm47, %v40, 0
    %51 = vmatpush.msra.mxu0 0.0
    %52 = vmatpush.msra.mxu0 0.0
    %53 = vmatpush.msra.mxu0 0.0
    %54 = vmatpush.msra.mxu0 0.0
    %55 = vmatpush.msra.mxu0 0.0
    %56 = vmatpush.msra.mxu0 0.0
    %57 = vmatpush.msra.mxu0 0.0
    %58 = vmatpush.msra.mxu0 0.0
    %59 = vmatpush.msra.mxu0 0.0
    %60 = vmatpush.msra.mxu0 0.0
    %61 = vmatpush.msra.mxu0 0.0
    %62 = vmatpush.msra.mxu0 0.0
    %63 = vmatpush.msra.mxu0 0.0
    %64 = vmatpush.msra.mxu0 0.0
    %65 = vmatpush.msra.mxu0 %v42
    %66 = vmatpush.msra.mxu0 %v41
    %67 = vmatmul.f32.gmra.mxu0 %v49
    %v68 = vpop.f32.mrf.mxu0
    %v69 = vadd.f32 %v45, %v68
    %70 = vdwg.mxu0
    %v71 = vld [vmem:[%s2] sm:$0xff]
    %v72 = vld [vmem:[%s2 + $0x8] sm:$0xff]
    %v73 = vld [vmem:[%s2 + $0x10] sm:$0xff]
    %v74 = vld [vmem:[%s2 + $0x18] sm:$0xff]
    %vm75 = vcmask 261120
    %v77 = vsel %vm75, 0.0, 0
    %79 = vmatpush.msra.mxu0 0.0
    %80 = vmatpush.msra.mxu0 0.0
    %81 = vmatpush.msra.mxu0 0.0
    %82 = vmatpush.msra.mxu0 0.0
    %83 = vmatpush.msra.mxu0 0.0
    %84 = vmatpush.msra.mxu0 0.0
    %85 = vmatpush.msra.mxu0 0.0
    %86 = vmatpush.msra.mxu0 0.0
    %87 = vmatpush.msra.mxu0 0.0
    %88 = vmatpush.msra.mxu0 0.0
    %89 = vmatpush.msra.mxu0 0.0
    %90 = vmatpush.msra.mxu0 0.0
    %91 = vmatpush.msra.mxu0 %v74
    %92 = vmatpush.msra.mxu0 %v73
    %93 = vmatpush.msra.mxu0 %v72
    %94 = vmatpush.msra.mxu0 %v71
    %95 = vmatmul.f32.gmra.mxu0 %v77
    %v96 = vpop.f32.mrf.mxu0
    %v97 = vadd.f32 0.0, %v96
    %98 = vdwg.mxu0
    %v99 = vadd.f32 %v69, %v97
    %v100 = vtanh.pop %v99
    %v101 = vmul.f32 %v100, 0.5
    %v102 = vadd.f32 %v101, 0.5
    %v103 = vmul.f32 %v102, 0.0
    %105 = vrot.lane.b32.xlu0 %v100, 64
    %v106 = vpop.permute.xlu0 %105
    %v108 = vmul.f32 %v102, %v106
    %110 = vrot.lane.b32.xlu0 %v108, 32
    %v111 = vpop.permute.xlu0 %110
    %v113 = vadd.f32 %v103, %v111
    %v114 = vtanh.pop %v113
    %116 = vrot.lane.b32.xlu0 %v114, 64
    %v117 = vpop.permute.xlu0 %116
    %v119 = vmul.f32 %v102, %v117
    %121 = vrot.lane.b32.xlu0 %v119, 32
    %v122 = vpop.permute.xlu0 %121
    %v123 = vsel %vm75, %v122, 0
    %125 = vmatpush.msra.mxu0 0.0
    %126 = vmatpush.msra.mxu0 0.0
    %127 = vmatpush.msra.mxu0 0.0
    %128 = vmatpush.msra.mxu0 0.0
    %129 = vmatpush.msra.mxu0 0.0
    %130 = vmatpush.msra.mxu0 0.0
    %131 = vmatpush.msra.mxu0 0.0
    %132 = vmatpush.msra.mxu0 0.0
    %133 = vmatpush.msra.mxu0 0.0
    %134 = vmatpush.msra.mxu0 0.0
    %135 = vmatpush.msra.mxu0 0.0
    %136 = vmatpush.msra.mxu0 0.0
    %137 = vmatpush.msra.mxu0 %v74
    %138 = vmatpush.msra.mxu0 %v73
    %139 = vmatpush.msra.mxu0 %v72
    %140 = vmatpush.msra.mxu0 %v71
    %141 = vmatmul.f32.gmra.mxu0 %v123
    %v142 = vpop.f32.mrf.mxu0
    %v143 = vadd.f32 0.0, %v142
    %144 = vdwg.mxu0
    %v146 = vrot.slane %v143, 7
    %v148 = vadd.f32 %v69, %v146
    %v149 = vtanh.pop %v148
    %v150 = vmul.f32 %v149, 0.5
    %v151 = vadd.f32 %v150, 0.5
    %v153 = vrot.slane %v113, 7
    %v155 = vmul.f32 %v151, %v153
    %157 = vrot.lane.b32.xlu0 %v149, 64
    %v158 = vpop.permute.xlu0 %157
    %v160 = vmul.f32 %v151, %v158
    %162 = vrot.lane.b32.xlu0 %v160, 32
    %v163 = vpop.permute.xlu0 %162
    %v165 = vadd.f32 %v155, %v163
    %v166 = vtanh.pop %v165
    %168 = vrot.lane.b32.xlu0 %v166, 64
    %v169 = vpop.permute.xlu0 %168
    %v171 = vmul.f32 %v151, %v169
    %v173 = vrot.slane %v171, 1
    %174 = vrot.lane.b32.xlu0 %v173, 32
    %v175 = vpop.permute.xlu0 %174
    %v176 = vsel %vm75, %v175, 0
    %178 = vmatpush.msra.mxu0 0.0
    %179 = vmatpush.msra.mxu0 0.0
    %180 = vmatpush.msra.mxu0 0.0
    %181 = vmatpush.msra.mxu0 0.0
    %182 = vmatpush.msra.mxu0 0.0
    %183 = vmatpush.msra.mxu0 0.0
    %184 = vmatpush.msra.mxu0 0.0
    %185 = vmatpush.msra.mxu0 0.0
    %186 = vmatpush.msra.mxu0 0.0
    %187 = vmatpush.msra.mxu0 0.0
    %188 = vmatpush.msra.mxu0 0.0
    %189 = vmatpush.msra.mxu0 0.0
    %190 = vmatpush.msra.mxu0 %v74
    %191 = vmatpush.msra.mxu0 %v73
    %192 = vmatpush.msra.mxu0 %v72
    %193 = vmatpush.msra.mxu0 %v71
    %194 = vmatmul.f32.gmra.mxu0 %v176
    %v195 = vpop.f32.mrf.mxu0
    %v196 = vadd.f32 0.0, %v195
    %197 = vdwg.mxu0
    %v199 = vrot.slane %v196, 6
    %v201 = vadd.f32 %v69, %v199
    %v202 = vtanh.pop %v201
    %v203 = vmul.f32 %v202, 0.5
    %v204 = vadd.f32 %v203, 0.5
    %v206 = vrot.slane %v165, 7
    %v208 = vmul.f32 %v204, %v206
    %210 = vrot.lane.b32.xlu0 %v202, 64
    %v211 = vpop.permute.xlu0 %210
    %v213 = vmul.f32 %v204, %v211
    %215 = vrot.lane.b32.xlu0 %v213, 32
    %v216 = vpop.permute.xlu0 %215
    %v218 = vadd.f32 %v208, %v216
    %v219 = vtanh.pop %v218
    %221 = vrot.lane.b32.xlu0 %v219, 64
    %v222 = vpop.permute.xlu0 %221
    %v224 = vmul.f32 %v204, %v222
    %v226 = vrot.slane %v224, 2
    %227 = vrot.lane.b32.xlu0 %v226, 32
    %v228 = vpop.permute.xlu0 %227
    %v229 = vsel %vm75, %v228, 0
    %231 = vmatpush.msra.mxu0 0.0
    %232 = vmatpush.msra.mxu0 0.0
    %233 = vmatpush.msra.mxu0 0.0
    %234 = vmatpush.msra.mxu0 0.0
    %235 = vmatpush.msra.mxu0 0.0
    %236 = vmatpush.msra.mxu0 0.0
    %237 = vmatpush.msra.mxu0 0.0
    %238 = vmatpush.msra.mxu0 0.0
    %239 = vmatpush.msra.mxu0 0.0
    %240 = vmatpush.msra.mxu0 0.0
    %241 = vmatpush.msra.mxu0 0.0
    %242 = vmatpush.msra.mxu0 0.0
    %243 = vmatpush.msra.mxu0 %v74
    %244 = vmatpush.msra.mxu0 %v73
    %245 = vmatpush.msra.mxu0 %v72
    %246 = vmatpush.msra.mxu0 %v71
    %247 = vmatmul.f32.gmra.mxu0 %v229
    %v248 = vpop.f32.mrf.mxu0
    %v249 = vadd.f32 0.0, %v248
    %250 = vdwg.mxu0
    %v252 = vrot.slane %v249, 5
    %v254 = vadd.f32 %v69, %v252
    %v255 = vtanh.pop %v254
    %v256 = vmul.f32 %v255, 0.5
    %v257 = vadd.f32 %v256, 0.5
    %v259 = vrot.slane %v218, 7
    %v261 = vmul.f32 %v257, %v259
    %263 = vrot.lane.b32.xlu0 %v255, 64
    %v264 = vpop.permute.xlu0 %263
    %v266 = vmul.f32 %v257, %v264
    %268 = vrot.lane.b32.xlu0 %v266, 32
    %v269 = vpop.permute.xlu0 %268
    %v271 = vadd.f32 %v261, %v269
    %v272 = vtanh.pop %v271
    %274 = vrot.lane.b32.xlu0 %v272, 64
    %v275 = vpop.permute.xlu0 %274
    %v277 = vmul.f32 %v257, %v275
    %v279 = vrot.slane %v277, 3
    %280 = vrot.lane.b32.xlu0 %v279, 32
    %v281 = vpop.permute.xlu0 %280
    %v282 = vsel %vm75, %v281, 0
    %284 = vmatpush.msra.mxu0 0.0
    %285 = vmatpush.msra.mxu0 0.0
    %286 = vmatpush.msra.mxu0 0.0
    %287 = vmatpush.msra.mxu0 0.0
    %288 = vmatpush.msra.mxu0 0.0
    %289 = vmatpush.msra.mxu0 0.0
    %290 = vmatpush.msra.mxu0 0.0
    %291 = vmatpush.msra.mxu0 0.0
    %292 = vmatpush.msra.mxu0 0.0
    %293 = vmatpush.msra.mxu0 0.0
    %294 = vmatpush.msra.mxu0 0.0
    %295 = vmatpush.msra.mxu0 0.0
    %296 = vmatpush.msra.mxu0 %v74
    %297 = vmatpush.msra.mxu0 %v73
    %298 = vmatpush.msra.mxu0 %v72
    %299 = vmatpush.msra.mxu0 %v71
    %300 = vmatmul.f32.gmra.mxu0 %v282
    %v301 = vpop.f32.mrf.mxu0
    %v302 = vadd.f32 0.0, %v301
    %303 = vdwg.mxu0
    %v305 = vrot.slane %v302, 4
    %v307 = vadd.f32 %v69, %v305
    %v308 = vtanh.pop %v307
    %v309 = vmul.f32 %v308, 0.5
    %v310 = vadd.f32 %v309, 0.5
    %v312 = vrot.slane %v271, 7
    %v314 = vmul.f32 %v310, %v312
    %316 = vrot.lane.b32.xlu0 %v308, 64
    %v317 = vpop.permute.xlu0 %316
    %v319 = vmul.f32 %v310, %v317
    %321 = vrot.lane.b32.xlu0 %v319, 32
    %v322 = vpop.permute.xlu0 %321
    %v324 = vadd.f32 %v314, %v322
    %v325 = vtanh.pop %v324
    %327 = vrot.lane.b32.xlu0 %v325, 64
    %v328 = vpop.permute.xlu0 %327
    %v330 = vmul.f32 %v310, %v328
    %v332 = vrot.slane %v330, 4
    %333 = vrot.lane.b32.xlu0 %v332, 32
    %v334 = vpop.permute.xlu0 %333
    %v335 = vsel %vm75, %v334, 0
    %337 = vmatpush.msra.mxu0 0.0
    %338 = vmatpush.msra.mxu0 0.0
    %339 = vmatpush.msra.mxu0 0.0
    %340 = vmatpush.msra.mxu0 0.0
    %341 = vmatpush.msra.mxu0 0.0
    %342 = vmatpush.msra.mxu0 0.0
    %343 = vmatpush.msra.mxu0 0.0
    %344 = vmatpush.msra.mxu0 0.0
    %345 = vmatpush.msra.mxu0 0.0
    %346 = vmatpush.msra.mxu0 0.0
    %347 = vmatpush.msra.mxu0 0.0
    %348 = vmatpush.msra.mxu0 0.0
    %349 = vmatpush.msra.mxu0 %v74
    %350 = vmatpush.msra.mxu0 %v73
    %351 = vmatpush.msra.mxu0 %v72
    %352 = vmatpush.msra.mxu0 %v71
    %353 = vmatmul.f32.gmra.mxu0 %v335
    %v354 = vpop.f32.mrf.mxu0
    %v355 = vadd.f32 0.0, %v354
    %356 = vdwg.mxu0
    %v358 = vrot.slane %v355, 3
    %v360 = vadd.f32 %v69, %v358
    %v361 = vtanh.pop %v360
    %v362 = vmul.f32 %v361, 0.5
    %v363 = vadd.f32 %v362, 0.5
    %v365 = vrot.slane %v324, 7
    %v367 = vmul.f32 %v363, %v365
    %369 = vrot.lane.b32.xlu0 %v361, 64
    %v370 = vpop.permute.xlu0 %369
    %v372 = vmul.f32 %v363, %v370
    %374 = vrot.lane.b32.xlu0 %v372, 32
    %v375 = vpop.permute.xlu0 %374
    %v377 = vadd.f32 %v367, %v375
    %v378 = vtanh.pop %v377
    %380 = vrot.lane.b32.xlu0 %v378, 64
    %v381 = vpop.permute.xlu0 %380
    %v383 = vmul.f32 %v363, %v381
    %v385 = vrot.slane %v383, 5
    %386 = vrot.lane.b32.xlu0 %v385, 32
    %v387 = vpop.permute.xlu0 %386
    %v388 = vsel %vm75, %v387, 0
    %390 = vmatpush.msra.mxu0 0.0
    %391 = vmatpush.msra.mxu0 0.0
    %392 = vmatpush.msra.mxu0 0.0
    %393 = vmatpush.msra.mxu0 0.0
    %394 = vmatpush.msra.mxu0 0.0
    %395 = vmatpush.msra.mxu0 0.0
    %396 = vmatpush.msra.mxu0 0.0
    %397 = vmatpush.msra.mxu0 0.0
    %398 = vmatpush.msra.mxu0 0.0
    %399 = vmatpush.msra.mxu0 0.0
    %400 = vmatpush.msra.mxu0 0.0
    %401 = vmatpush.msra.mxu0 0.0
    %402 = vmatpush.msra.mxu0 %v74
    %403 = vmatpush.msra.mxu0 %v73
    %404 = vmatpush.msra.mxu0 %v72
    %405 = vmatpush.msra.mxu0 %v71
    %406 = vmatmul.f32.gmra.mxu0 %v388
    %v407 = vpop.f32.mrf.mxu0
    %v408 = vadd.f32 0.0, %v407
    %409 = vdwg.mxu0
    %v411 = vrot.slane %v408, 2
    %v413 = vadd.f32 %v69, %v411
    %v414 = vtanh.pop %v413
    %v415 = vmul.f32 %v414, 0.5
    %v416 = vadd.f32 %v415, 0.5
    %v418 = vrot.slane %v377, 7
    %v420 = vmul.f32 %v416, %v418
    %422 = vrot.lane.b32.xlu0 %v414, 64
    %v423 = vpop.permute.xlu0 %422
    %v425 = vmul.f32 %v416, %v423
    %427 = vrot.lane.b32.xlu0 %v425, 32
    %v428 = vpop.permute.xlu0 %427
    %v430 = vadd.f32 %v420, %v428
    %v431 = vtanh.pop %v430
    %433 = vrot.lane.b32.xlu0 %v431, 64
    %v434 = vpop.permute.xlu0 %433
    %v436 = vmul.f32 %v416, %v434
    %v438 = vrot.slane %v436, 6
    %439 = vrot.lane.b32.xlu0 %v438, 32
    %v440 = vpop.permute.xlu0 %439
    %v441 = vsel %vm75, %v440, 0
    %443 = vmatpush.msra.mxu0 0.0
    %444 = vmatpush.msra.mxu0 0.0
    %445 = vmatpush.msra.mxu0 0.0
    %446 = vmatpush.msra.mxu0 0.0
    %447 = vmatpush.msra.mxu0 0.0
    %448 = vmatpush.msra.mxu0 0.0
    %449 = vmatpush.msra.mxu0 0.0
    %450 = vmatpush.msra.mxu0 0.0
    %451 = vmatpush.msra.mxu0 0.0
    %452 = vmatpush.msra.mxu0 0.0
    %453 = vmatpush.msra.mxu0 0.0
    %454 = vmatpush.msra.mxu0 0.0
    %455 = vmatpush.msra.mxu0 %v74
    %456 = vmatpush.msra.mxu0 %v73
    %457 = vmatpush.msra.mxu0 %v72
    %458 = vmatpush.msra.mxu0 %v71
    %459 = vmatmul.f32.gmra.mxu0 %v441
    %v460 = vpop.f32.mrf.mxu0
    %v461 = vadd.f32 0.0, %v460
    %462 = vdwg.mxu0
    %v464 = vrot.slane %v461, 1
    %v466 = vadd.f32 %v69, %v464
    %v467 = vtanh.pop %v466
    %v468 = vmul.f32 %v467, 0.5
    %v469 = vadd.f32 %v468, 0.5
    %v471 = vrot.slane %v430, 7
    %v473 = vmul.f32 %v469, %v471
    %475 = vrot.lane.b32.xlu0 %v467, 64
    %v476 = vpop.permute.xlu0 %475
    %v478 = vmul.f32 %v469, %v476
    %480 = vrot.lane.b32.xlu0 %v478, 32
    %v481 = vpop.permute.xlu0 %480
    %v483 = vadd.f32 %v473, %v481
    %v484 = vtanh.pop %v483
    %486 = vrot.lane.b32.xlu0 %v484, 64
    %v487 = vpop.permute.xlu0 %486
    %v489 = vmul.f32 %v469, %v487
    %vm490 = vcmask 1040384
    %v491 = vsel %vm490, %v119, %v171
    %vm492 = vcmask 1041408
    %v493 = vsel %vm492, %v491, %v224
    %vm494 = vcmask 1042432
    %v495 = vsel %vm494, %v493, %v277
    %vm496 = vcmask 1043456
    %v497 = vsel %vm496, %v495, %v330
    %vm498 = vcmask 1044480
    %v499 = vsel %vm498, %v497, %v383
    %vm500 = vcmask 1045504
    %v501 = vsel %vm500, %v499, %v436
    %vm502 = vcmask 1046528
    %v503 = vsel %vm502, %v501, %v489
    %v504 = vld [vmem:[%s4] sm:$0xff]
    %v505 = vld [vmem:[%s4 + $0x8] sm:$0xff]
    %v506 = vld [vmem:[%s4 + $0x10] sm:$0xff]
    %v507 = vld [vmem:[%s4 + $0x18] sm:$0xff]
    %v508 = vld [vmem:[%s5] sm:$0x1]
    %v510 = vperm.slane %v508, 0
    %513 = vrot.lane.b32.xlu0 %v503, 32
    %v514 = vpop.permute.xlu0 %513
    %v515 = vsel %vm75, %v514, 0
    %517 = vmatpush.msra.mxu0 0.0
    %518 = vmatpush.msra.mxu0 0.0
    %519 = vmatpush.msra.mxu0 0.0
    %520 = vmatpush.msra.mxu0 0.0
    %521 = vmatpush.msra.mxu0 0.0
    %522 = vmatpush.msra.mxu0 0.0
    %523 = vmatpush.msra.mxu0 0.0
    %524 = vmatpush.msra.mxu0 0.0
    %525 = vmatpush.msra.mxu0 0.0
    %526 = vmatpush.msra.mxu0 0.0
    %527 = vmatpush.msra.mxu0 0.0
    %528 = vmatpush.msra.mxu0 0.0
    %529 = vmatpush.msra.mxu0 %v507
    %530 = vmatpush.msra.mxu0 %v506
    %531 = vmatpush.msra.mxu0 %v505
    %532 = vmatpush.msra.mxu0 %v504
    %533 = vmatmul.f32.gmra.mxu0 %v515
    %v534 = vpop.f32.mrf.mxu0
    %v535 = vadd.f32 %v510, %v534
    %536 = vdwg.mxu0
    %vm537 = vcmask 64512
    %538 = vst.msk [vmem:[#allocation5] sm:$0xff] %vm537, %v535
    // Predicated region
    $region30: #{tpu_custom_call.1} parent=1 // pred_check
      _
    $region31: #{tpu_custom_call.1} parent=1 // pred_check_branch
      %540 = sbr.rel (0) target = $region33
    $region32: #{tpu_custom_call.1} parent=1 // pred_region
      %542 = vsyncadd [#allocation4], 0
      %s544 = sshll.u32 [#allocation5], 4
      %s545 = int_to_ptr.vmem [resolvable:$true] %s544
      %s546 = sshll.u32 %s6, 4
      %s547 = int_to_ptr.hbm [resolvable:$true] %s546
      %549 = dma.vmem_to_hbm [thread:$0]  %s545, 128, %s547, [#allocation4]
    $region33: #{tpu_custom_call.1} parent=1 // pred_fallthru
      _
    // Predicated region
    $region34: #{tpu_custom_call.1} parent=1 // pred_check
      _
    $region35: #{tpu_custom_call.1} parent=1 // pred_check_branch
      %551 = sbr.rel (0) target = $region37
    $region36: #{tpu_custom_call.1} parent=1 // pred_region
      %553 = dma.done [#allocation4], 128
    $region37: #{tpu_custom_call.1} parent=1 // pred_fallthru
      _
    %554 = vsyncpa [#allocation3], 1
    %555 = vsyncpa [#allocation4], 1

</llo_original>
